<compile_context>
chip_gen: v5e
topology: v5e:2x2
jax: 0.10.0
libtpu: 0.0.40
codegen_flags: <defaults>
</compile_context>

<pallas_src>
import functools

import jax
import jax.numpy as jnp
from jax.experimental import pallas as pl
from jax.experimental.pallas import tpu as pltpu


def _round_up(n, m):
    return ((n + m - 1) // m) * m


def _per_batch_mean(h, batch, n_ctx):
    """(batch*n_ctx, Lp) -> (batch, Lp): mean over each batch's n_ctx rows."""
    if batch <= 16 or (n_ctx % 8 != 0):
        # Small B (or ragged N): unrolled static slices + sublane reduces.
        return jnp.concatenate(
            [jnp.mean(h[b * n_ctx:(b + 1) * n_ctx], axis=0, keepdims=True)
             for b in range(batch)], axis=0)
    # Large B with sublane-aligned N: layout-preserving reshape + axis-1 mean.
    return jnp.mean(h.reshape(batch, n_ctx, h.shape[-1]), axis=1)


def _encoder_kernel(x_ref, y_ref, w1_ref, w234_ref, b_ref, o_ref, *,
                    batch, n_ctx, out_rows):
    """Single-invocation encoder.

    x_ref: (B*N, Dx) f32, y_ref: (B*N, Dy) f32.
    w1_ref: (Dp, Lp) f32 (rows [0:Dx]=x weights, [Dx:Dx+Dy]=y weights, rest 0).
    w234_ref: (3, Lp, Lp) in compute dtype (f32 or bf16) = stacked w2, w3, w4.
    b_ref: (8, Lp) f32, rows 0..3 = b1..b4.
    o_ref: (out_rows, Lp) f32 (rows >= batch are don't-care padding).
    """
    cdt = w234_ref.dtype              # MXU input dtype; accumulation is f32.
    lp = w234_ref.shape[-1]

    x = x_ref[...]                    # (R, Dx) f32
    y = y_ref[...]                    # (R, Dy) f32
    dx = x.shape[1]
    dy = y.shape[1]
    d_in = dx + dy

    # ---- Layer 1: concat(x, y) @ w1 + b1, without materializing the concat.
    if d_in <= 16:
        # Tiny contraction dim -> VPU broadcast FMAs instead of a padded MXU op.
        h = b_ref[0:1, :]                                   # (1, Lp) f32
        for j in range(dx):
            h = h + x[:, j:j + 1] * w1_ref[j:j + 1, :]      # (R,1)*(1,Lp)
        for j in range(dy):
            h = h + y[:, j:j + 1] * w1_ref[dx + j:dx + j + 1, :]
    else:
        # Fallback for a wide input dim: split-w1 MXU matmuls.
        w1 = w1_ref[...].astype(cdt)
        h = (jnp.dot(x.astype(cdt), w1[:dx],
                     preferred_element_type=jnp.float32)
             + jnp.dot(y.astype(cdt), w1[dx:d_in],
                       preferred_element_type=jnp.float32)
             + b_ref[0:1, :])
    h = jnp.maximum(h, 0.0)                                  # (R, Lp) f32

    # ---- Layers 2 & 3 (MXU, f32 accumulation; bias/ReLU in f32).
    h = jnp.maximum(
        jnp.dot(h.astype(cdt), w234_ref[0],
                preferred_element_type=jnp.float32) + b_ref[1:2, :], 0.0)
    h = jnp.maximum(
        jnp.dot(h.astype(cdt), w234_ref[1],
                preferred_element_type=jnp.float32) + b_ref[2:3, :], 0.0)

    # ---- Per-batch mean BEFORE the last linear (mean_n(H) @ W == mean_n(H @ W)).
    m = _per_batch_mean(h, batch, n_ctx)                     # (B, Lp) f32
    if out_rows > batch:
        # Pad rows to a full sublane tile so the final store is an unmasked vst.
        m = jnp.concatenate(
            [m, jnp.zeros((out_rows - batch, lp), jnp.float32)], axis=0)

    # ---- Layer 4 on the pooled representation only.
    o_ref[...] = (jnp.dot(m.astype(cdt), w234_ref[2],
                          preferred_element_type=jnp.float32) + b_ref[3:4, :])


def prepare_params(params, *, use_bf16_matmul=False):
    """One-time weight prep: lane-pad to Lp=round_up(L,128), stack, (opt.) cast.

    Run once; the per-call forward then contains no pad/convert ops.
    """
    L = params["w1"].shape[1]
    d_in = params["w1"].shape[0]
    Lp = _round_up(L, 128)
    Dp = _round_up(d_in, 8)
    cdt = jnp.bfloat16 if use_bf16_matmul else jnp.float32

    # Layer-1 weight stays f32 (consumed by the VPU broadcast-FMA path).
    w1 = jnp.pad(params["w1"].astype(jnp.float32),
                 ((0, Dp - d_in), (0, Lp - L)))                  # (Dp, Lp)

    def pad_sq(w):
        return jnp.pad(w.astype(jnp.float32), ((0, Lp - L), (0, Lp - L)))

    w234 = jnp.stack([pad_sq(params["w2"]), pad_sq(params["w3"]),
                      pad_sq(params["w4"])]).astype(cdt)          # (3, Lp, Lp)

    def pad_b(b):
        return jnp.pad(b.astype(jnp.float32).reshape(-1), (0, Lp - L))

    b = jnp.stack([pad_b(params["b1"]), pad_b(params["b2"]),
                   pad_b(params["b3"]), pad_b(params["b4"])])     # (4, Lp)
    b = jnp.pad(b, ((0, 8 - b.shape[0]), (0, 0)))                 # (8, Lp)

    return dict(w1=w1, w234=w234, b=b)


@functools.partial(jax.jit, static_argnames=("latent_dim",))
def deterministic_encoder_forward(x_context, y_context, prepped, *, latent_dim):
    """x_context: (B, N, Dx), y_context: (B, N, Dy) -> (B, 1, latent_dim)."""
    B, N, Dx = x_context.shape
    _, _, Dy = y_context.shape
    Lp = prepped["w234"].shape[-1]
    out_rows = _round_up(max(B, 8), 8)

    # Free reshapes; inputs stay f32 (layer 1 runs on the VPU in f32).
    x2d = x_context.reshape(B * N, Dx).astype(jnp.float32)
    y2d = y_context.reshape(B * N, Dy).astype(jnp.float32)

    kernel = functools.partial(_encoder_kernel, batch=B, n_ctx=N,
                               out_rows=out_rows)

    out2d = pl.pallas_call(
        kernel,
        out_shape=jax.ShapeDtypeStruct((out_rows, Lp), jnp.float32),
        in_specs=[pl.BlockSpec(memory_space=pltpu.MemorySpace.VMEM)] * 5,
        out_specs=pl.BlockSpec(memory_space=pltpu.MemorySpace.VMEM),
        compiler_params=pltpu.CompilerParams(
            vmem_limit_bytes=32 * 1024 * 1024),
    )(x2d, y2d, prepped["w1"], prepped["w234"], prepped["b"])

    # Un-pad rows/lanes and restore the keepdim axis: (B, 1, L).
    return out2d[:B, None, :latent_dim]


def make_params(key, d_in, latent_dim):
    """Deterministic parameter init (stand-in for init_sequential_weights)."""
    keys = jax.random.split(key, 8)

    def lin(kw, kb, fan_in, fan_out):
        scale = 1.0 / jnp.sqrt(fan_in)
        w = jax.random.uniform(kw, (fan_in, fan_out), jnp.float32, -scale, scale)
        b = jax.random.uniform(kb, (1, fan_out), jnp.float32, -scale, scale)
        return w, b

    w1, b1 = lin(keys[0], keys[1], d_in, latent_dim)
    w2, b2 = lin(keys[2], keys[3], latent_dim, latent_dim)
    w3, b3 = lin(keys[4], keys[5], latent_dim, latent_dim)
    w4, b4 = lin(keys[6], keys[7], latent_dim, latent_dim)
    return dict(w1=w1, b1=b1, w2=w2, b2=b2, w3=w3, b3=b3, w4=w4, b4=b4)


def reference_encoder(x_context, y_context, params):
    hp = jax.lax.Precision.HIGHEST
    x = jnp.concatenate([x_context, y_context], axis=-1).astype(jnp.float32)
    h = jnp.maximum(jnp.dot(x, params["w1"], precision=hp) + params["b1"], 0.0)
    h = jnp.maximum(jnp.dot(h, params["w2"], precision=hp) + params["b2"], 0.0)
    h = jnp.maximum(jnp.dot(h, params["w3"], precision=hp) + params["b3"], 0.0)
    h = jnp.dot(h, params["w4"], precision=hp) + params["b4"]
    return jnp.mean(h, axis=1, keepdims=True)


if __name__ == "__main__":
    B, N, Dx, Dy, L = 2, 16, 2, 1, 32

    key = jax.random.PRNGKey(0)
    k_x, k_y, k_p = jax.random.split(key, 3)
    x_context = jax.random.normal(k_x, (B, N, Dx), jnp.float32)
    y_context = jax.random.normal(k_y, (B, N, Dy), jnp.float32)
    params = make_params(k_p, Dx + Dy, L)

    ref = reference_encoder(x_context, y_context, params)

    # f32 path: matches the PyTorch f32 module semantics.
    prepped = prepare_params(params, use_bf16_matmul=False)
    out = jax.block_until_ready(
        deterministic_encoder_forward(x_context, y_context, prepped, latent_dim=L))
    assert out.shape == (B, 1, L), out.shape
    assert jnp.allclose(out, ref, atol=5e-5, rtol=1e-5), "f32 mismatch vs reference"

    # bf16-matmul fast path (preferred on v6e/v7x bf16-native MXUs).
    prepped_bf16 = prepare_params(params, use_bf16_matmul=True)
    out_bf16 = jax.block_until_ready(
        deterministic_encoder_forward(x_context, y_context, prepped_bf16, latent_dim=L))
    assert out_bf16.shape == (B, 1, L), out_bf16.shape
    assert jnp.allclose(out_bf16, ref, atol=5e-2, rtol=5e-2), "bf16 mismatch vs reference"

    print("KERNEL_OK")
</pallas_src>

<mosaic_0001>
module attributes {stable_mosaic.version = 11 : i64} {
  func.func @_encoder_kernel(%arg0: memref<32x2xf32, #tpu.memory_space<vmem>>, %arg1: memref<32x1xf32, #tpu.memory_space<vmem>>, %arg2: memref<8x128xf32, #tpu.memory_space<vmem>>, %arg3: memref<3x128x128xf32, #tpu.memory_space<vmem>>, %arg4: memref<8x128xf32, #tpu.memory_space<vmem>>, %arg5: memref<8x128xf32, #tpu.memory_space<vmem>>) attributes {dimension_semantics = [], scalar_prefetch = 0 : i64, scratch_operands = 0 : i64, tpu.core_type = #tpu.core_type<tc>} {
    %c0 = arith.constant 0 : index
    %c0_0 = arith.constant 0 : index
    %0 = vector.load %arg0[%c0, %c0_0] : memref<32x2xf32, #tpu.memory_space<vmem>>, vector<32x2xf32>
    %c0_1 = arith.constant 0 : index
    %c0_2 = arith.constant 0 : index
    %1 = vector.load %arg1[%c0_1, %c0_2] : memref<32x1xf32, #tpu.memory_space<vmem>>, vector<32x1xf32>
    %c0_3 = arith.constant 0 : index
    %c0_4 = arith.constant 0 : index
    %2 = vector.load %arg4[%c0_3, %c0_4] : memref<8x128xf32, #tpu.memory_space<vmem>>, vector<1x128xf32>
    %3 = vector.extract_strided_slice %0 {offsets = [0, 0], sizes = [32, 1], strides = [1, 1]} : vector<32x2xf32> to vector<32x1xf32>
    %c0_5 = arith.constant 0 : index
    %c0_6 = arith.constant 0 : index
    %4 = vector.load %arg2[%c0_5, %c0_6] : memref<8x128xf32, #tpu.memory_space<vmem>>, vector<1x128xf32>
    %5 = vector.broadcast %3 : vector<32x1xf32> to vector<32x128xf32>
    %6 = vector.broadcast %4 : vector<1x128xf32> to vector<32x128xf32>
    %7 = arith.mulf %5, %6 : vector<32x128xf32>
    %8 = vector.broadcast %2 : vector<1x128xf32> to vector<32x128xf32>
    %9 = arith.addf %8, %7 : vector<32x128xf32>
    %10 = vector.extract_strided_slice %0 {offsets = [0, 1], sizes = [32, 1], strides = [1, 1]} : vector<32x2xf32> to vector<32x1xf32>
    %c1 = arith.constant 1 : index
    %c0_7 = arith.constant 0 : index
    %11 = vector.load %arg2[%c1, %c0_7] : memref<8x128xf32, #tpu.memory_space<vmem>>, vector<1x128xf32>
    %12 = vector.broadcast %10 : vector<32x1xf32> to vector<32x128xf32>
    %13 = vector.broadcast %11 : vector<1x128xf32> to vector<32x128xf32>
    %14 = arith.mulf %12, %13 : vector<32x128xf32>
    %15 = arith.addf %9, %14 : vector<32x128xf32>
    %c2 = arith.constant 2 : index
    %c0_8 = arith.constant 0 : index
    %16 = vector.load %arg2[%c2, %c0_8] : memref<8x128xf32, #tpu.memory_space<vmem>>, vector<1x128xf32>
    %17 = vector.broadcast %1 : vector<32x1xf32> to vector<32x128xf32>
    %18 = vector.broadcast %16 : vector<1x128xf32> to vector<32x128xf32>
    %19 = arith.mulf %17, %18 : vector<32x128xf32>
    %20 = arith.addf %15, %19 : vector<32x128xf32>
    %cst = arith.constant 0.000000e+00 : f32
    %21 = vector.broadcast %cst : f32 to vector<32x128xf32>
    %22 = arith.maximumf %20, %21 : vector<32x128xf32>
    %c0_9 = arith.constant 0 : index
    %c0_10 = arith.constant 0 : index
    %c0_11 = arith.constant 0 : index
    %23 = vector.load %arg3[%c0_9, %c0_10, %c0_11] : memref<3x128x128xf32, #tpu.memory_space<vmem>>, vector<1x128x128xf32>
    %24 = vector.shape_cast %23 : vector<1x128x128xf32> to vector<128x128xf32>
    %cst_12 = arith.constant dense<0.000000e+00> : vector<32x128xf32>
    %25 = tpu.matmul %22, %24, %cst_12 {dimension_numbers = #tpu.dot_dimension_numbers<[1], [0], [0], [1], [0, 0, 1, 1], [], []>} : vector<32x128xf32>, vector<128x128xf32>, vector<32x128xf32> -> vector<32x128xf32>
    %c1_13 = arith.constant 1 : index
    %c0_14 = arith.constant 0 : index
    %26 = vector.load %arg4[%c1_13, %c0_14] : memref<8x128xf32, #tpu.memory_space<vmem>>, vector<1x128xf32>
    %27 = vector.broadcast %26 : vector<1x128xf32> to vector<32x128xf32>
    %28 = arith.addf %25, %27 : vector<32x128xf32>
    %cst_15 = arith.constant 0.000000e+00 : f32
    %29 = vector.broadcast %cst_15 : f32 to vector<32x128xf32>
    %30 = arith.maximumf %28, %29 : vector<32x128xf32>
    %c1_16 = arith.constant 1 : index
    %c0_17 = arith.constant 0 : index
    %c0_18 = arith.constant 0 : index
    %31 = vector.load %arg3[%c1_16, %c0_17, %c0_18] : memref<3x128x128xf32, #tpu.memory_space<vmem>>, vector<1x128x128xf32>
    %32 = vector.shape_cast %31 : vector<1x128x128xf32> to vector<128x128xf32>
    %cst_19 = arith.constant dense<0.000000e+00> : vector<32x128xf32>
    %33 = tpu.matmul %30, %32, %cst_19 {dimension_numbers = #tpu.dot_dimension_numbers<[1], [0], [0], [1], [0, 0, 1, 1], [], []>} : vector<32x128xf32>, vector<128x128xf32>, vector<32x128xf32> -> vector<32x128xf32>
    %c2_20 = arith.constant 2 : index
    %c0_21 = arith.constant 0 : index
    %34 = vector.load %arg4[%c2_20, %c0_21] : memref<8x128xf32, #tpu.memory_space<vmem>>, vector<1x128xf32>
    %35 = vector.broadcast %34 : vector<1x128xf32> to vector<32x128xf32>
    %36 = arith.addf %33, %35 : vector<32x128xf32>
    %cst_22 = arith.constant 0.000000e+00 : f32
    %37 = vector.broadcast %cst_22 : f32 to vector<32x128xf32>
    %38 = arith.maximumf %36, %37 : vector<32x128xf32>
    %39 = vector.extract_strided_slice %38 {offsets = [0, 0], sizes = [16, 128], strides = [1, 1]} : vector<32x128xf32> to vector<16x128xf32>
    %cst_23 = arith.constant dense<0.000000e+00> : vector<128xf32>
    %40 = vector.multi_reduction <add>, %39, %cst_23 [0] : vector<16x128xf32> to vector<128xf32>
    %41 = vector.shape_cast %40 : vector<128xf32> to vector<1x128xf32>
    %cst_24 = arith.constant 1.600000e+01 : f32
    %42 = vector.broadcast %cst_24 : f32 to vector<1x128xf32>
    %43 = arith.divf %41, %42 : vector<1x128xf32>
    %44 = vector.extract_strided_slice %38 {offsets = [16, 0], sizes = [16, 128], strides = [1, 1]} : vector<32x128xf32> to vector<16x128xf32>
    %cst_25 = arith.constant dense<0.000000e+00> : vector<128xf32>
    %45 = vector.multi_reduction <add>, %44, %cst_25 [0] : vector<16x128xf32> to vector<128xf32>
    %46 = vector.shape_cast %45 : vector<128xf32> to vector<1x128xf32>
    %cst_26 = arith.constant 1.600000e+01 : f32
    %47 = vector.broadcast %cst_26 : f32 to vector<1x128xf32>
    %48 = arith.divf %46, %47 : vector<1x128xf32>
    %49 = tpu.concatenate %43, %48 in 0 : vector<1x128xf32>, vector<1x128xf32> -> vector<2x128xf32>
    %cst_27 = arith.constant 0.000000e+00 : f32
    %50 = vector.broadcast %cst_27 : f32 to vector<6x128xf32>
    %51 = tpu.concatenate %49, %50 in 0 : vector<2x128xf32>, vector<6x128xf32> -> vector<8x128xf32>
    %c2_28 = arith.constant 2 : index
    %c0_29 = arith.constant 0 : index
    %c0_30 = arith.constant 0 : index
    %52 = vector.load %arg3[%c2_28, %c0_29, %c0_30] : memref<3x128x128xf32, #tpu.memory_space<vmem>>, vector<1x128x128xf32>
    %53 = vector.shape_cast %52 : vector<1x128x128xf32> to vector<128x128xf32>
    %cst_31 = arith.constant dense<0.000000e+00> : vector<8x128xf32>
    %54 = tpu.matmul %51, %53, %cst_31 {dimension_numbers = #tpu.dot_dimension_numbers<[1], [0], [0], [1], [0, 0, 1, 1], [], []>} : vector<8x128xf32>, vector<128x128xf32>, vector<8x128xf32> -> vector<8x128xf32>
    %c3 = arith.constant 3 : index
    %c0_32 = arith.constant 0 : index
    %55 = vector.load %arg4[%c3, %c0_32] : memref<8x128xf32, #tpu.memory_space<vmem>>, vector<1x128xf32>
    %56 = vector.broadcast %55 : vector<1x128xf32> to vector<8x128xf32>
    %57 = arith.addf %54, %56 : vector<8x128xf32>
    %c0_33 = arith.constant 0 : index
    %c0_34 = arith.constant 0 : index
    %58 = vector.load %arg5[%c0_33, %c0_34] : memref<8x128xf32, #tpu.memory_space<vmem>>, vector<8x128xf32>
    tpu.vector_store %arg5[%c0_33, %c0_34], %57 {strides = array<i32>} : memref<8x128xf32, #tpu.memory_space<vmem>>, vector<8x128xf32>,
    return
  }
}

</mosaic_0001>

<llo_original>
// kernel: deterministic_encoder_forward.1
$region0: #{deterministic_encoder_forward.1}
  #allocation0 [shape = 'u32[]', space=smem, size = 0x4, offset = 0x4, fixed_abs, tag = 'smem constant byte address 0x4 - core index']
  #allocation1 [shape = 'u32[72,128]{1,0:T(1,128)}', space=vmem, size = 0x9000, scoped, tag = 'internal scratch']
  %s0 = inlined_call_operand.vmem [shape: f32[32,2], index: 0, kind: input, shape index: {}]
  %s1 = inlined_call_operand.vmem [shape: f32[32,1], index: 1, kind: input, shape index: {}]
  %s2 = inlined_call_operand.vmem [shape: f32[8,128], index: 2, kind: input, shape index: {}]
  %s3 = inlined_call_operand.hbm [shape: f32[3,128,128], index: 3, kind: input, shape index: {}]
  %s4 = inlined_call_operand.vmem [shape: f32[8,128], index: 4, kind: input, shape index: {}]
  %s5 = inlined_call_operand.vmem [shape: f32[8,128], index: 5, kind: output, shape index: {}]
  %s6 = sld [smem:[#allocation0]]
  $region34: #{deterministic_encoder_forward.1} parent=0
    _
  %s8 = ssub.s32 1, %s6
  %s9 = scalar_select 0, %s8, %s6
  $region1: #{deterministic_encoder_forward.1} parent=0
    #allocation2 [shape = 'u8[196608]{0}', space=vmem, size = 0x30000, scoped, tag = 'input window, operand 3, single buffered']
    #allocation3 [shape = 's32[1]{0}', space=sflag, size = 0x4, scoped, tag = 'scoped memory for deterministic_encoder_forward.1']
    %10 = vsyncpa [#allocation3], 0
    // Predicated region
    $region2: #{deterministic_encoder_forward.1} parent=1 // pred_check
      _
    $region3: #{deterministic_encoder_forward.1} parent=1 // pred_check_branch
      %12 = sbr.rel (0) target = $region5
    $region4: #{deterministic_encoder_forward.1} parent=1 // pred_region
      _
    $region5: #{deterministic_encoder_forward.1} parent=1 // pred_fallthru
      _
    // Predicated region
    $region6: #{deterministic_encoder_forward.1} parent=1 // pred_check
      _
    $region7: #{deterministic_encoder_forward.1} parent=1 // pred_check_branch
      %14 = sbr.rel (0) target = $region9
    $region8: #{deterministic_encoder_forward.1} parent=1 // pred_region
      _
    $region9: #{deterministic_encoder_forward.1} parent=1 // pred_fallthru
      _
    // Predicated region
    $region10: #{deterministic_encoder_forward.1} parent=1 // pred_check
      _
    $region11: #{deterministic_encoder_forward.1} parent=1 // pred_check_branch
      %16 = sbr.rel (0) target = $region13
    $region12: #{deterministic_encoder_forward.1} parent=1 // pred_region
      _
    $region13: #{deterministic_encoder_forward.1} parent=1 // pred_fallthru
      _
    // Predicated region
    $region14: #{deterministic_encoder_forward.1} parent=1 // pred_check
      _
    $region15: #{deterministic_encoder_forward.1} parent=1 // pred_check_branch
      %18 = sbr.rel (0) target = $region17
    $region16: #{deterministic_encoder_forward.1} parent=1 // pred_region
      %20 = vsyncadd [#allocation3], 0
      %s21 = sshll.u32 %s3, 4
      %s22 = int_to_ptr.hbm [resolvable:$true] %s21
      %s23 = sshll.u32 [#allocation2], 4
      %s24 = int_to_ptr.vmem [resolvable:$true] %s23
      %29 = dma.hbm_to_vmem [thread:$0]  %s22, 6144, %s24, [#allocation3], 128, 128, 8
    $region17: #{deterministic_encoder_forward.1} parent=1 // pred_fallthru
      _
    // Predicated region
    $region18: #{deterministic_encoder_forward.1} parent=1 // pred_check
      _
    $region19: #{deterministic_encoder_forward.1} parent=1 // pred_check_branch
      %31 = sbr.rel (0) target = $region21
    $region20: #{deterministic_encoder_forward.1} parent=1 // pred_region
      _
    $region21: #{deterministic_encoder_forward.1} parent=1 // pred_fallthru
      _
    // Predicated region
    $region22: #{deterministic_encoder_forward.1} parent=1 // pred_check
      _
    $region23: #{deterministic_encoder_forward.1} parent=1 // pred_check_branch
      %33 = sbr.rel (0) target = $region25
    $region24: #{deterministic_encoder_forward.1} parent=1 // pred_region
      %35 = dma.done [#allocation3], 6144
    $region25: #{deterministic_encoder_forward.1} parent=1 // pred_fallthru
      _
    %v36 = vld [vmem:[%s0] sm:$0xff]
    %v37 = vld [vmem:[%s0 + $0x8] sm:$0xff]
    %v38 = vld [vmem:[%s0 + $0x10] sm:$0xff]
    %v39 = vld [vmem:[%s0 + $0x18] sm:$0xff]
    %v40 = vld [vmem:[%s1] sm:$0xff]
    %v41 = vld [vmem:[%s1 + $0x8] sm:$0xff]
    %v42 = vld [vmem:[%s1 + $0x10] sm:$0xff]
    %v43 = vld [vmem:[%s1 + $0x18] sm:$0xff]
    %v44 = vld [vmem:[%s4] sm:$0x1]
    %v45 = vld [vmem:[%s2] sm:$0x1]
    %47 = vset.pattern.permute.xlu0 0
    %48 = vperm.xlu0 %47, %v36
    %v49 = vpop.permute.xlu0 %48
    %52 = vset.pattern.permute.xlu0 0
    %53 = vperm.xlu0 %52, %v37
    %v54 = vpop.permute.xlu0 %53
    %57 = vset.pattern.permute.xlu0 0
    %58 = vperm.xlu0 %57, %v38
    %v59 = vpop.permute.xlu0 %58
    %62 = vset.pattern.permute.xlu0 0
    %63 = vperm.xlu0 %62, %v39
    %v64 = vpop.permute.xlu0 %63
    %v66 = vperm.slane %v45, 0
    %v67 = vmul.f32 %v49, %v66
    %v68 = vmul.f32 %v54, %v66
    %v69 = vmul.f32 %v59, %v66
    %v70 = vmul.f32 %v64, %v66
    %v71 = vperm.slane %v44, 0
    %v72 = vadd.f32 %v71, %v67
    %v73 = vadd.f32 %v71, %v68
    %v74 = vadd.f32 %v71, %v69
    %v75 = vadd.f32 %v71, %v70
    %v76 = vld [vmem:[%s2 + $0x1] sm:$0x1]
    %77 = vset.pattern.permute.xlu0 1
    %78 = vperm.xlu0 %77, %v36
    %v79 = vpop.permute.xlu0 %78
    %81 = vset.pattern.permute.xlu0 1
    %82 = vperm.xlu0 %81, %v37
    %v83 = vpop.permute.xlu0 %82
    %85 = vset.pattern.permute.xlu0 1
    %86 = vperm.xlu0 %85, %v38
    %v87 = vpop.permute.xlu0 %86
    %89 = vset.pattern.permute.xlu0 1
    %90 = vperm.xlu0 %89, %v39
    %v91 = vpop.permute.xlu0 %90
    %v93 = vperm.slane %v76, 0
    %v94 = vmul.f32 %v79, %v93
    %v95 = vmul.f32 %v83, %v93
    %v96 = vmul.f32 %v87, %v93
    %v97 = vmul.f32 %v91, %v93
    %v98 = vadd.f32 %v72, %v94
    %v99 = vadd.f32 %v73, %v95
    %v100 = vadd.f32 %v74, %v96
    %v101 = vadd.f32 %v75, %v97
    %v102 = vld [vmem:[%s2 + $0x2] sm:$0x1]
    %104 = vset.pattern.permute.xlu0 0
    %105 = vperm.xlu0 %104, %v40
    %v106 = vpop.permute.xlu0 %105
    %109 = vset.pattern.permute.xlu0 0
    %110 = vperm.xlu0 %109, %v41
    %v111 = vpop.permute.xlu0 %110
    %114 = vset.pattern.permute.xlu0 0
    %115 = vperm.xlu0 %114, %v42
    %v116 = vpop.permute.xlu0 %115
    %119 = vset.pattern.permute.xlu0 0
    %120 = vperm.xlu0 %119, %v43
    %v121 = vpop.permute.xlu0 %120
    %v123 = vperm.slane %v102, 0
    %v124 = vmul.f32 %v106, %v123
    %v125 = vmul.f32 %v111, %v123
    %v126 = vmul.f32 %v116, %v123
    %v127 = vmul.f32 %v121, %v123
    %v128 = vadd.f32 %v98, %v124
    %v129 = vadd.f32 %v99, %v125
    %v130 = vadd.f32 %v100, %v126
    %v131 = vadd.f32 %v101, %v127
    %v132 = vmax.f32 %v128, 0.0
    %v133 = vmax.f32 %v129, 0.0
    %v134 = vmax.f32 %v130, 0.0
    %v135 = vmax.f32 %v131, 0.0
    %v136 = vld [vmem:[#allocation2] sm:$0xff]
    %v137 = vld [vmem:[#allocation2 + $0x8] sm:$0xff]
    %v138 = vld [vmem:[#allocation2 + $0x10] sm:$0xff]
    %v139 = vld [vmem:[#allocation2 + $0x18] sm:$0xff]
    %v140 = vld [vmem:[#allocation2 + $0x20] sm:$0xff]
    %v141 = vld [vmem:[#allocation2 + $0x28] sm:$0xff]
    %v142 = vld [vmem:[#allocation2 + $0x30] sm:$0xff]
    %v143 = vld [vmem:[#allocation2 + $0x38] sm:$0xff]
    %v144 = vld [vmem:[#allocation2 + $0x40] sm:$0xff]
    %v145 = vld [vmem:[#allocation2 + $0x48] sm:$0xff]
    %v146 = vld [vmem:[#allocation2 + $0x50] sm:$0xff]
    %v147 = vld [vmem:[#allocation2 + $0x58] sm:$0xff]
    %v148 = vld [vmem:[#allocation2 + $0x60] sm:$0xff]
    %v149 = vld [vmem:[#allocation2 + $0x68] sm:$0xff]
    %v150 = vld [vmem:[#allocation2 + $0x70] sm:$0xff]
    %v151 = vld [vmem:[#allocation2 + $0x78] sm:$0xff]
    %v152 = vld [vmem:[%s4 + $0x1] sm:$0x1]
    %v153 = vperm.slane %v152, 0
    %154 = vmatpush.msra.mxu0 %v151
    %155 = vmatpush.msra.mxu0 %v150
    %156 = vmatpush.msra.mxu0 %v149
    %157 = vmatpush.msra.mxu0 %v148
    %158 = vmatpush.msra.mxu0 %v147
    %159 = vmatpush.msra.mxu0 %v146
    %160 = vmatpush.msra.mxu0 %v145
    %161 = vmatpush.msra.mxu0 %v144
    %162 = vmatpush.msra.mxu0 %v143
    %163 = vmatpush.msra.mxu0 %v142
    %164 = vmatpush.msra.mxu0 %v141
    %165 = vmatpush.msra.mxu0 %v140
    %166 = vmatpush.msra.mxu0 %v139
    %167 = vmatpush.msra.mxu0 %v138
    %168 = vmatpush.msra.mxu0 %v137
    %169 = vmatpush.msra.mxu0 %v136
    %170 = vmatmul.f32.gmra.mxu0 %v132
    %v171 = vpop.f32.mrf.mxu0
    %v172 = vadd.f32 %v153, %v171
    %173 = vmatmul.f32.gmra.mxu0 %v133
    %v174 = vpop.f32.mrf.mxu0
    %v175 = vadd.f32 %v153, %v174
    %176 = vmatmul.f32.gmra.mxu0 %v134
    %v177 = vpop.f32.mrf.mxu0
    %v178 = vadd.f32 %v153, %v177
    %179 = vmatmul.f32.gmra.mxu0 %v135
    %v180 = vpop.f32.mrf.mxu0
    %v181 = vadd.f32 %v153, %v180
    %182 = vdwg.mxu0
    %v183 = vmax.f32 %v172, 0.0
    %v184 = vmax.f32 %v175, 0.0
    %v185 = vmax.f32 %v178, 0.0
    %v186 = vmax.f32 %v181, 0.0
    %s187 = scalar_lea.vmem [#allocation2], 128
    %v188 = vld [vmem:[%s187] sm:$0xff]
    %v189 = vld [vmem:[%s187 + $0x8] sm:$0xff]
    %v190 = vld [vmem:[%s187 + $0x10] sm:$0xff]
    %v191 = vld [vmem:[%s187 + $0x18] sm:$0xff]
    %v192 = vld [vmem:[%s187 + $0x20] sm:$0xff]
    %v193 = vld [vmem:[%s187 + $0x28] sm:$0xff]
    %v194 = vld [vmem:[%s187 + $0x30] sm:$0xff]
    %v195 = vld [vmem:[%s187 + $0x38] sm:$0xff]
    %v196 = vld [vmem:[%s187 + $0x40] sm:$0xff]
    %v197 = vld [vmem:[%s187 + $0x48] sm:$0xff]
    %v198 = vld [vmem:[%s187 + $0x50] sm:$0xff]
    %v199 = vld [vmem:[%s187 + $0x58] sm:$0xff]
    %v200 = vld [vmem:[%s187 + $0x60] sm:$0xff]
    %v201 = vld [vmem:[%s187 + $0x68] sm:$0xff]
    %v202 = vld [vmem:[%s187 + $0x70] sm:$0xff]
    %v203 = vld [vmem:[%s187 + $0x78] sm:$0xff]
    %v204 = vld [vmem:[%s4 + $0x2] sm:$0x1]
    %v205 = vperm.slane %v204, 0
    %206 = vmatpush.msra.mxu0 %v203
    %207 = vmatpush.msra.mxu0 %v202
    %208 = vmatpush.msra.mxu0 %v201
    %209 = vmatpush.msra.mxu0 %v200
    %210 = vmatpush.msra.mxu0 %v199
    %211 = vmatpush.msra.mxu0 %v198
    %212 = vmatpush.msra.mxu0 %v197
    %213 = vmatpush.msra.mxu0 %v196
    %214 = vmatpush.msra.mxu0 %v195
    %215 = vmatpush.msra.mxu0 %v194
    %216 = vmatpush.msra.mxu0 %v193
    %217 = vmatpush.msra.mxu0 %v192
    %218 = vmatpush.msra.mxu0 %v191
    %219 = vmatpush.msra.mxu0 %v190
    %220 = vmatpush.msra.mxu0 %v189
    %221 = vmatpush.msra.mxu0 %v188
    %222 = vmatmul.f32.gmra.mxu0 %v183
    %v223 = vpop.f32.mrf.mxu0
    %v224 = vadd.f32 %v205, %v223
    %225 = vmatmul.f32.gmra.mxu0 %v184
    %v226 = vpop.f32.mrf.mxu0
    %v227 = vadd.f32 %v205, %v226
    %228 = vmatmul.f32.gmra.mxu0 %v185
    %v229 = vpop.f32.mrf.mxu0
    %v230 = vadd.f32 %v205, %v229
    %231 = vmatmul.f32.gmra.mxu0 %v186
    %v232 = vpop.f32.mrf.mxu0
    %v233 = vadd.f32 %v205, %v232
    %234 = vdwg.mxu0
    %v235 = vmax.f32 %v224, 0.0
    %v236 = vmax.f32 %v227, 0.0
    %v237 = vmax.f32 %v230, 0.0
    %v238 = vmax.f32 %v233, 0.0
    %v239 = vadd.f32 %v235, %v236
    %v240 = vrot.slane %v239, 4
    %v241 = vadd.f32 %v239, %v240
    %v242 = vrot.slane %v241, 2
    %v243 = vadd.f32 %v241, %v242
    %v244 = vrot.slane %v243, 1
    %v245 = vadd.f32 %v243, %v244
    %v246 = vrcp.pop 16.0
    %v247 = vmul.f32 16.0, %v246
    %v248 = vsub.f32 1.0, %v247
    %v249 = vmul.f32 %v246, %v248
    %v250 = vadd.f32 %v246, %v249
    %vm251 = vweird.f32 %v246
    %v252 = vsel %vm251, %v246, %v250
    %v253 = vmul.f32 %v245, %v252
    %v254 = vadd.f32 %v237, %v238
    %v255 = vrot.slane %v254, 4
    %v256 = vadd.f32 %v254, %v255
    %v257 = vrot.slane %v256, 2
    %v258 = vadd.f32 %v256, %v257
    %v259 = vrot.slane %v258, 1
    %v260 = vadd.f32 %v258, %v259
    %v261 = vmul.f32 %v260, %v252
    %vm262 = vcmask 1040384
    %v263 = vsel %vm262, %v253, %v261
    %vm264 = vcmask 1041408
    %v265 = vsel %vm264, %v263, 0.0
    %s266 = scalar_lea.vmem [#allocation2], 256
    %v267 = vld [vmem:[%s266] sm:$0xff]
    %v268 = vld [vmem:[%s266 + $0x8] sm:$0xff]
    %v269 = vld [vmem:[%s266 + $0x10] sm:$0xff]
    %v270 = vld [vmem:[%s266 + $0x18] sm:$0xff]
    %v271 = vld [vmem:[%s266 + $0x20] sm:$0xff]
    %v272 = vld [vmem:[%s266 + $0x28] sm:$0xff]
    %v273 = vld [vmem:[%s266 + $0x30] sm:$0xff]
    %v274 = vld [vmem:[%s266 + $0x38] sm:$0xff]
    %v275 = vld [vmem:[%s266 + $0x40] sm:$0xff]
    %v276 = vld [vmem:[%s266 + $0x48] sm:$0xff]
    %v277 = vld [vmem:[%s266 + $0x50] sm:$0xff]
    %v278 = vld [vmem:[%s266 + $0x58] sm:$0xff]
    %v279 = vld [vmem:[%s266 + $0x60] sm:$0xff]
    %v280 = vld [vmem:[%s266 + $0x68] sm:$0xff]
    %v281 = vld [vmem:[%s266 + $0x70] sm:$0xff]
    %v282 = vld [vmem:[%s266 + $0x78] sm:$0xff]
    %v283 = vld [vmem:[%s4 + $0x3] sm:$0x1]
    %v284 = vperm.slane %v283, 0
    %285 = vmatpush.msra.mxu0 %v282
    %286 = vmatpush.msra.mxu0 %v281
    %287 = vmatpush.msra.mxu0 %v280
    %288 = vmatpush.msra.mxu0 %v279
    %289 = vmatpush.msra.mxu0 %v278
    %290 = vmatpush.msra.mxu0 %v277
    %291 = vmatpush.msra.mxu0 %v276
    %292 = vmatpush.msra.mxu0 %v275
    %293 = vmatpush.msra.mxu0 %v274
    %294 = vmatpush.msra.mxu0 %v273
    %295 = vmatpush.msra.mxu0 %v272
    %296 = vmatpush.msra.mxu0 %v271
    %297 = vmatpush.msra.mxu0 %v270
    %298 = vmatpush.msra.mxu0 %v269
    %299 = vmatpush.msra.mxu0 %v268
    %300 = vmatpush.msra.mxu0 %v267
    %301 = vmatmul.f32.gmra.mxu0 %v265
    %v302 = vpop.f32.mrf.mxu0
    %v303 = vadd.f32 %v284, %v302
    %304 = vdwg.mxu0
    %305 = vst [vmem:[%s5] sm:$0xff] %v303
    // Predicated region
    $region26: #{deterministic_encoder_forward.1} parent=1 // pred_check
      _
    $region27: #{deterministic_encoder_forward.1} parent=1 // pred_check_branch
      %307 = sbr.rel (0) target = $region29
    $region28: #{deterministic_encoder_forward.1} parent=1 // pred_region
      _
    $region29: #{deterministic_encoder_forward.1} parent=1 // pred_fallthru
      _
    // Predicated region
    $region30: #{deterministic_encoder_forward.1} parent=1 // pred_check
      _
    $region31: #{deterministic_encoder_forward.1} parent=1 // pred_check_branch
      %309 = sbr.rel (0) target = $region33
    $region32: #{deterministic_encoder_forward.1} parent=1 // pred_region
      _
    $region33: #{deterministic_encoder_forward.1} parent=1 // pred_fallthru
      _
    %310 = vsyncpa [#allocation3], 1

</llo_original>
